<compile_context>
chip_gen: v7x
topology: tpu7x:2x2x1
jax: 0.10.0
libtpu: 0.0.40
codegen_flags: <defaults>
</compile_context>

<pallas_src>
import math

import jax
import jax.numpy as jnp
import numpy as np
from jax import lax
from jax.experimental import pallas as pl
from jax.experimental.pallas import tpu as pltpu


def _cnn_gemm_kernel(p_ref, w_ref, scale_ref, shift_ref, o_ref):
    """Fused im2col-GEMM + folded BatchNorm affine.

    p_ref:     (N, K, TM)    im2col patches, K = KH*KW*Cin, TM = spatial tile
    w_ref:     (Cout, K)     conv weights, K ordered as (kh, kw, cin)
    scale_ref: (Cout, 1)     folded BN scale
    shift_ref: (Cout, 1)     folded BN shift (includes conv bias)
    o_ref:     (N, Cout, TM) lane-dense output (TM is a multiple of 128)
    """
    w = w_ref[...]            # (Cout, K)
    scale = scale_ref[...]    # (Cout, 1)
    shift = shift_ref[...]    # (Cout, 1)
    n_img = o_ref.shape[0]
    for n in range(n_img):    # static, small batch -> unrolled
        # Single MXU contraction per image; accumulator is (Cout, TM) = dense.
        acc = jnp.dot(w, p_ref[n], preferred_element_type=jnp.float32)
        o_ref[n] = (acc * scale + shift).astype(o_ref.dtype)


def cnn_layer_forward(x_nchw, weight_hwio, bias, gamma, beta,
                      running_mean, running_var, eps=1e-5, spatial_tiles=1):
    """Pallas implementation of CNN_layer.forward (eval mode)."""
    N, Cin, H, W = x_nchw.shape
    KH, KW, _, Cout = weight_hwio.shape
    ph, pw = (KH - 1) // 2, (KW - 1) // 2
    HW = H * W
    K = KH * KW * Cin

    assert HW % spatial_tiles == 0
    TM = HW // spatial_tiles
    assert spatial_tiles == 1 or TM % 128 == 0, "spatial tile must be 128-dense"

    # --- wrapper-side layout plumbing (plain JAX, tiny arrays) ---
    # Zero-pad spatial dims and build im2col patches with K = (kh, kw, cin)
    # ordering; spatial positions flattened (h, w) on the lane axis.
    x_pad = jnp.pad(x_nchw, ((0, 0), (0, 0), (ph, ph), (pw, pw)))
    taps = [x_pad[:, :, kh:kh + H, kw:kw + W]            # (N, Cin, H, W) each
            for kh in range(KH) for kw in range(KW)]
    patches = jnp.stack(taps, axis=1)                    # (N, KH*KW, Cin, H, W)
    patches = patches.reshape(N, K, HW).astype(jnp.float32)

    # Weights (KH, KW, Cin, Cout) -> (Cout, K) with matching (kh, kw, cin) order.
    w2d = jnp.transpose(weight_hwio, (3, 0, 1, 2)).reshape(Cout, K)
    w2d = w2d.astype(jnp.float32)

    # Fold conv bias + eval-mode BatchNorm into a per-channel affine.
    scale = gamma / jnp.sqrt(running_var + eps)          # (Cout,)
    shift = beta - running_mean * scale + bias * scale   # (Cout,)
    scale2d = scale.reshape(Cout, 1).astype(jnp.float32)
    shift2d = shift.reshape(Cout, 1).astype(jnp.float32)

    out = pl.pallas_call(
        _cnn_gemm_kernel,
        out_shape=jax.ShapeDtypeStruct((N, Cout, HW), x_nchw.dtype),
        grid=(spatial_tiles,),
        in_specs=[
            pl.BlockSpec((N, K, TM), lambda i: (0, 0, i)),
            pl.BlockSpec((Cout, K), lambda i: (0, 0)),
            pl.BlockSpec((Cout, 1), lambda i: (0, 0)),
            pl.BlockSpec((Cout, 1), lambda i: (0, 0)),
        ],
        out_specs=pl.BlockSpec((N, Cout, TM), lambda i: (0, 0, i)),
        compiler_params=pltpu.CompilerParams(
            dimension_semantics=("parallel",)),
    )(patches, w2d, scale2d, shift2d)

    # Free reshape back to NCHW (no transpose needed).
    return out.reshape(N, Cout, H, W)


def _reference(x_nchw, weight_hwio, bias, gamma, beta, rm, rv, eps=1e-5):
    x_nhwc = jnp.transpose(x_nchw, (0, 2, 3, 1))
    y = lax.conv_general_dilated(
        x_nhwc, weight_hwio, window_strides=(1, 1), padding="SAME",
        dimension_numbers=("NHWC", "HWIO", "NHWC"))
    y = y + bias
    y = (y - rm) / jnp.sqrt(rv + eps) * gamma + beta
    return jnp.transpose(y, (0, 3, 1, 2))


if __name__ == "__main__":
    # Module config: CNN_layer(in_channels=4, out_channels=8,
    #                          kernel_size=(3,3), dropout=0.1)
    N, Cin, H, W = 2, 4, 16, 16
    Cout, KH, KW = 8, 3, 3

    key = jax.random.PRNGKey(0)
    kx, kw, kb = jax.random.split(key, 3)

    x = jax.random.normal(kx, (N, Cin, H, W), dtype=jnp.float32)

    # Deterministic parameter init (PyTorch-style Kaiming-uniform bounds).
    fan_in = Cin * KH * KW
    bound_w = math.sqrt(1.0 / fan_in) * math.sqrt(3.0)
    weight_hwio = jax.random.uniform(kw, (KH, KW, Cin, Cout),
                                     minval=-bound_w, maxval=bound_w,
                                     dtype=jnp.float32)
    bound_b = 1.0 / math.sqrt(fan_in)
    bias = jax.random.uniform(kb, (Cout,), minval=-bound_b, maxval=bound_b,
                              dtype=jnp.float32)

    # BatchNorm2d parameters at fresh init (eval mode).
    gamma = jnp.ones((Cout,), jnp.float32)
    beta = jnp.zeros((Cout,), jnp.float32)
    running_mean = jnp.zeros((Cout,), jnp.float32)
    running_var = jnp.ones((Cout,), jnp.float32)

    out = cnn_layer_forward(x, weight_hwio, bias, gamma, beta,
                            running_mean, running_var)
    out = jax.block_until_ready(out)

    ref = _reference(x, weight_hwio, bias, gamma, beta,
                     running_mean, running_var)
    np.testing.assert_allclose(np.asarray(out), np.asarray(ref),
                               rtol=1e-4, atol=1e-4)
    assert out.shape == (N, Cout, H, W)
    print("KERNEL_OK")
</pallas_src>

<mosaic_0001>
module attributes {stable_mosaic.version = 11 : i64} {
  func.func @_cnn_gemm_kernel(%arg0: i32, %arg1: memref<2x36x256xf32, #tpu.memory_space<vmem>>, %arg2: memref<8x36xf32, #tpu.memory_space<vmem>>, %arg3: memref<8x1xf32, #tpu.memory_space<vmem>>, %arg4: memref<8x1xf32, #tpu.memory_space<vmem>>, %arg5: memref<2x8x256xf32, #tpu.memory_space<vmem>>) attributes {dimension_semantics = [#tpu.dimension_semantics<parallel>], iteration_bounds = array<i64: 1>, scalar_prefetch = 0 : i64, scratch_operands = 0 : i64, tpu.core_type = #tpu.core_type<tc>, window_params = [{transform_indices = @transform_0, window_bounds = array<i64: 2, 36, 256>}, {pipeline_mode = #tpu.pipeline_mode<synchronous>, transform_indices = @transform_1, window_bounds = array<i64: 8, 36>}, {pipeline_mode = #tpu.pipeline_mode<synchronous>, transform_indices = @transform_2, window_bounds = array<i64: 8, 1>}, {pipeline_mode = #tpu.pipeline_mode<synchronous>, transform_indices = @transform_3, window_bounds = array<i64: 8, 1>}, {transform_indices = @transform_4, window_bounds = array<i64: 2, 8, 256>}]} {
    %c0 = arith.constant 0 : index
    %c0_0 = arith.constant 0 : index
    %0 = vector.load %arg2[%c0, %c0_0] : memref<8x36xf32, #tpu.memory_space<vmem>>, vector<8x36xf32>
    %c0_1 = arith.constant 0 : index
    %c0_2 = arith.constant 0 : index
    %1 = vector.load %arg3[%c0_1, %c0_2] : memref<8x1xf32, #tpu.memory_space<vmem>>, vector<8x1xf32>
    %c0_3 = arith.constant 0 : index
    %c0_4 = arith.constant 0 : index
    %2 = vector.load %arg4[%c0_3, %c0_4] : memref<8x1xf32, #tpu.memory_space<vmem>>, vector<8x1xf32>
    %c0_5 = arith.constant 0 : index
    %c0_6 = arith.constant 0 : index
    %c0_7 = arith.constant 0 : index
    %3 = vector.load %arg1[%c0_5, %c0_6, %c0_7] : memref<2x36x256xf32, #tpu.memory_space<vmem>>, vector<1x36x256xf32>
    %4 = vector.shape_cast %3 : vector<1x36x256xf32> to vector<36x256xf32>
    %cst = arith.constant dense<0.000000e+00> : vector<8x256xf32>
    %5 = tpu.matmul %0, %4, %cst {dimension_numbers = #tpu.dot_dimension_numbers<[1], [0], [0], [1], [0, 0, 1, 1], [], []>} : vector<8x36xf32>, vector<36x256xf32>, vector<8x256xf32> -> vector<8x256xf32>
    %6 = vector.broadcast %1 : vector<8x1xf32> to vector<8x256xf32>
    %7 = arith.mulf %5, %6 : vector<8x256xf32>
    %8 = vector.broadcast %2 : vector<8x1xf32> to vector<8x256xf32>
    %9 = arith.addf %7, %8 : vector<8x256xf32>
    %c0_8 = arith.constant 0 : index
    %c0_9 = arith.constant 0 : index
    %c0_10 = arith.constant 0 : index
    %10 = vector.load %arg5[%c0_8, %c0_9, %c0_10] : memref<2x8x256xf32, #tpu.memory_space<vmem>>, vector<1x8x256xf32>
    %11 = vector.shape_cast %10 : vector<1x8x256xf32> to vector<8x256xf32>
    %12 = vector.shape_cast %9 : vector<8x256xf32> to vector<1x8x256xf32>
    tpu.vector_store %arg5[%c0_8, %c0_9, %c0_10], %12 {strides = array<i32>} : memref<2x8x256xf32, #tpu.memory_space<vmem>>, vector<1x8x256xf32>,
    %c1 = arith.constant 1 : index
    %c0_11 = arith.constant 0 : index
    %c0_12 = arith.constant 0 : index
    %13 = vector.load %arg1[%c1, %c0_11, %c0_12] : memref<2x36x256xf32, #tpu.memory_space<vmem>>, vector<1x36x256xf32>
    %14 = vector.shape_cast %13 : vector<1x36x256xf32> to vector<36x256xf32>
    %cst_13 = arith.constant dense<0.000000e+00> : vector<8x256xf32>
    %15 = tpu.matmul %0, %14, %cst_13 {dimension_numbers = #tpu.dot_dimension_numbers<[1], [0], [0], [1], [0, 0, 1, 1], [], []>} : vector<8x36xf32>, vector<36x256xf32>, vector<8x256xf32> -> vector<8x256xf32>
    %16 = vector.broadcast %1 : vector<8x1xf32> to vector<8x256xf32>
    %17 = arith.mulf %15, %16 : vector<8x256xf32>
    %18 = vector.broadcast %2 : vector<8x1xf32> to vector<8x256xf32>
    %19 = arith.addf %17, %18 : vector<8x256xf32>
    %c1_14 = arith.constant 1 : index
    %c0_15 = arith.constant 0 : index
    %c0_16 = arith.constant 0 : index
    %20 = vector.load %arg5[%c1_14, %c0_15, %c0_16] : memref<2x8x256xf32, #tpu.memory_space<vmem>>, vector<1x8x256xf32>
    %21 = vector.shape_cast %20 : vector<1x8x256xf32> to vector<8x256xf32>
    %22 = vector.shape_cast %19 : vector<8x256xf32> to vector<1x8x256xf32>
    tpu.vector_store %arg5[%c1_14, %c0_15, %c0_16], %22 {strides = array<i32>} : memref<2x8x256xf32, #tpu.memory_space<vmem>>, vector<1x8x256xf32>,
    return
  }
  func.func @transform_0(%arg0: i32) -> (i32, i32, i32) {
    %c0_i32 = arith.constant 0 : i32
    %c0_i32_0 = arith.constant 0 : i32
    %c0_i32_1 = arith.constant 0 : i32
    return %c0_i32, %c0_i32_0, %arg0 : i32, i32, i32
  }
  func.func @transform_1(%arg0: i32) -> (i32, i32) {
    %c0_i32 = arith.constant 0 : i32
    %c0_i32_0 = arith.constant 0 : i32
    %c0_i32_1 = arith.constant 0 : i32
    return %c0_i32, %c0_i32_0 : i32, i32
  }
  func.func @transform_2(%arg0: i32) -> (i32, i32) {
    %c0_i32 = arith.constant 0 : i32
    %c0_i32_0 = arith.constant 0 : i32
    %c0_i32_1 = arith.constant 0 : i32
    return %c0_i32, %c0_i32_0 : i32, i32
  }
  func.func @transform_3(%arg0: i32) -> (i32, i32) {
    %c0_i32 = arith.constant 0 : i32
    %c0_i32_0 = arith.constant 0 : i32
    %c0_i32_1 = arith.constant 0 : i32
    return %c0_i32, %c0_i32_0 : i32, i32
  }
  func.func @transform_4(%arg0: i32) -> (i32, i32, i32) {
    %c0_i32 = arith.constant 0 : i32
    %c0_i32_0 = arith.constant 0 : i32
    %c0_i32_1 = arith.constant 0 : i32
    return %c0_i32, %c0_i32_0, %arg0 : i32, i32, i32
  }
}

</mosaic_0001>

<llo_original>
// kernel: tpu_custom_call.1
$region0: #{tpu_custom_call.1}
  #allocation0 [shape = 'u32[]', space=smem, size = 0x4, offset = 0x4, fixed_abs, tag = 'smem constant byte address 0x4 - core index']
  #allocation1 [shape = 'u32[144,128]{1,0:T(1,128)}', space=vmem, size = 0x12000, scoped, tag = 'internal scratch']
  %s0 = inlined_call_operand.vmem [shape: f32[2,36,256], index: 0, kind: input, shape index: {}]
  %s1 = inlined_call_operand.vmem [shape: f32[8,36], index: 1, kind: input, shape index: {}]
  %s2 = inlined_call_operand.vmem [shape: f32[8,1], index: 2, kind: input, shape index: {}]
  %s3 = inlined_call_operand.vmem [shape: f32[8,1], index: 3, kind: input, shape index: {}]
  %s4 = inlined_call_operand.hbm [shape: f32[2,8,256], index: 4, kind: output, shape index: {}]
  %s5 = sld [smem:[#allocation0]]
  $region26: #{tpu_custom_call.1} parent=0
    _
  %s7 = ssub.s32 1, %s5
  %s8 = scalar_select 0, %s7, %s5
  $region1: #{tpu_custom_call.1} parent=0
    #allocation2 [shape = 'u8[16384]{0}', space=vmem, size = 0x4000, scoped, tag = 'output window, operand 0, single buffered']
    #allocation3 [shape = 's32[1]{0}', space=sflag, size = 0x4, scoped, tag = 'scoped memory for tpu_custom_call.1']
    %9 = vsyncpa [#allocation3], 0
    // Predicated region
    $region2: #{tpu_custom_call.1} parent=1 // pred_check
      _
    $region3: #{tpu_custom_call.1} parent=1 // pred_check_branch
      %11 = sbr.rel (0) target = $region5
    $region4: #{tpu_custom_call.1} parent=1 // pred_region
      _
    $region5: #{tpu_custom_call.1} parent=1 // pred_fallthru
      _
    // Predicated region
    $region6: #{tpu_custom_call.1} parent=1 // pred_check
      _
    $region7: #{tpu_custom_call.1} parent=1 // pred_check_branch
      %13 = sbr.rel (0) target = $region9
    $region8: #{tpu_custom_call.1} parent=1 // pred_region
      _
    $region9: #{tpu_custom_call.1} parent=1 // pred_fallthru
      _
    // Predicated region
    $region10: #{tpu_custom_call.1} parent=1 // pred_check
      _
    $region11: #{tpu_custom_call.1} parent=1 // pred_check_branch
      %15 = sbr.rel (0) target = $region13
    $region12: #{tpu_custom_call.1} parent=1 // pred_region
      _
    $region13: #{tpu_custom_call.1} parent=1 // pred_fallthru
      _
    // Predicated region
    $region14: #{tpu_custom_call.1} parent=1 // pred_check
      _
    $region15: #{tpu_custom_call.1} parent=1 // pred_check_branch
      %17 = sbr.rel (0) target = $region17
    $region16: #{tpu_custom_call.1} parent=1 // pred_region
      _
    $region17: #{tpu_custom_call.1} parent=1 // pred_fallthru
      _
    %v18 = vld [vmem:[%s1] sm:$0xff]
    %v19 = vld [vmem:[%s2] sm:$0xff]
    %v20 = vld [vmem:[%s3] sm:$0xff]
    %v21 = vld [vmem:[%s0] sm:$0xff]
    %v22 = vld [vmem:[%s0 + $0x8] sm:$0xff]
    %v23 = vld [vmem:[%s0 + $0x10] sm:$0xff]
    %v24 = vld [vmem:[%s0 + $0x18] sm:$0xff]
    %v25 = vld [vmem:[%s0 + $0x20] sm:$0xff]
    %v26 = vld [vmem:[%s0 + $0x28] sm:$0xff]
    %v27 = vld [vmem:[%s0 + $0x30] sm:$0xff]
    %v28 = vld [vmem:[%s0 + $0x38] sm:$0xff]
    %v29 = vld [vmem:[%s0 + $0x40] sm:$0xf]
    %v30 = vld [vmem:[%s0 + $0x48] sm:$0xf]
    %vm31 = vcmask 293888
    %v33 = vsel %vm31, %v18, 0
    %vm35 = vcmask 1043456
    %v37 = vsel %vm35, %v29, 0
    %v40 = vsel %vm35, %v30, 0
    %42 = vmatprep.subr.mxu0 %v22
    %43 = vmatpush1.msra.mxu0 %v21
    %44 = vmatprep.subr.mxu0 %v24
    %45 = vmatpush1.msra.mxu0 %v23
    %46 = vmatprep.subr.mxu0 %v26
    %47 = vmatpush1.msra.mxu0 %v25
    %48 = vmatprep.subr.mxu0 %v28
    %49 = vmatpush1.msra.mxu0 %v27
    %50 = vmatprep.subr.mxu0 %v40
    %51 = vmatpush1.msra.mxu0 %v37
    %52 = vmatprep.subr.mxu0 0.0
    %53 = vmatpush1.msra.mxu0 0.0
    %54 = vmatprep.subr.mxu0 0.0
    %55 = vmatpush1.msra.mxu0 0.0
    %56 = vmatprep.subr.mxu0 0.0
    %57 = vmatpush1.msra.mxu0 0.0
    %58 = vmatprep.subr.mxu0 0.0
    %59 = vmatpush1.msra.mxu0 0.0
    %60 = vmatprep.subr.mxu0 0.0
    %61 = vmatpush1.msra.mxu0 0.0
    %62 = vmatprep.subr.mxu0 0.0
    %63 = vmatpush1.msra.mxu0 0.0
    %64 = vmatprep.subr.mxu0 0.0
    %65 = vmatpush1.msra.mxu0 0.0
    %66 = vmatprep.subr.mxu0 0.0
    %67 = vmatpush1.msra.mxu0 0.0
    %68 = vmatprep.subr.mxu0 0.0
    %69 = vmatpush1.msra.mxu0 0.0
    %70 = vmatprep.subr.mxu0 0.0
    %71 = vmatpush1.msra.mxu0 0.0
    %72 = vmatprep.subr.mxu0 0.0
    %73 = vmatpush1.msra.mxu0 0.0
    %74 = vmatprep.subr.mxu0 0.0
    %75 = vmatpush1.msra.mxu0 0.0
    %76 = vmatprep.subr.mxu0 0.0
    %77 = vmatpush1.msra.mxu0 0.0
    %78 = vmatprep.subr.mxu0 0.0
    %79 = vmatpush1.msra.mxu0 0.0
    %80 = vmatprep.subr.mxu0 0.0
    %81 = vmatpush1.msra.mxu0 0.0
    %82 = vmatprep.subr.mxu0 0.0
    %83 = vmatpush1.msra.mxu0 0.0
    %84 = vmatprep.subr.mxu0 0.0
    %85 = vmatpush1.msra.mxu0 0.0
    %86 = vmatprep.subr.mxu0 0.0
    %87 = vmatpush1.msra.mxu0 0.0
    %88 = vmatprep.subr.mxu0 0.0
    %89 = vmatpush1.msra.mxu0 0.0
    %90 = vmatprep.subr.mxu0 0.0
    %91 = vmatpush1.msra.mxu0 0.0
    %92 = vmatprep.subr.mxu0 0.0
    %93 = vmatpush1.msra.mxu0 0.0
    %94 = vmatprep.subr.mxu0 0.0
    %95 = vmatpush1.msra.mxu0 0.0
    %96 = vmatprep.subr.mxu0 0.0
    %97 = vmatpush1.msra.mxu0 0.0
    %98 = vmatprep.subr.mxu0 0.0
    %99 = vmatpush1.msra.mxu0 0.0
    %100 = vmatprep.subr.mxu0 0.0
    %101 = vmatpush1.msra.mxu0 0.0
    %102 = vmatprep.subr.mxu0 0.0
    %103 = vmatpush1.msra.mxu0 0.0
    %104 = vmatprep.subr.mxu0 0.0
    %105 = vmatpush1.msra.mxu0 0.0
    %106 = vmatprep.mubr.f32.mxu0 0.0
    %107 = vmatmul.mubr.f32.gmra.mrb[0].mxu0 %v33
    %v108 = vpop.f32.mrb[0].mxu0
    %v109 = vadd.f32 0.0, %v108
    %v110 = vpop.f32.mrb[0].mxu0
    %v111 = vadd.f32 0.0, %v110
    %112 = vdwg.mxu0
    %114 = vset.pattern.permute.xlu0 0
    %115 = vperm.xlu0 %114, %v19
    %v116 = vpop.permute.xlu0 %115
    %v118 = vmul.f32 %v109, %v116
    %v119 = vmul.f32 %v111, %v116
    %121 = vset.pattern.permute.xlu0 0
    %122 = vperm.xlu0 %121, %v20
    %v123 = vpop.permute.xlu0 %122
    %v125 = vadd.f32 %v118, %v123
    %v126 = vadd.f32 %v119, %v123
    %127 = vst [vmem:[#allocation2] sm:$0xff] %v125
    %128 = vst [vmem:[#allocation2 + $0x8] sm:$0xff] %v126
    %s129 = scalar_lea.vmem %s0, 80
    %v130 = vld [vmem:[%s129] sm:$0xff]
    %v131 = vld [vmem:[%s129 + $0x8] sm:$0xff]
    %v132 = vld [vmem:[%s129 + $0x10] sm:$0xff]
    %v133 = vld [vmem:[%s129 + $0x18] sm:$0xff]
    %v134 = vld [vmem:[%s129 + $0x20] sm:$0xff]
    %v135 = vld [vmem:[%s129 + $0x28] sm:$0xff]
    %v136 = vld [vmem:[%s129 + $0x30] sm:$0xff]
    %v137 = vld [vmem:[%s129 + $0x38] sm:$0xff]
    %v138 = vld [vmem:[%s129 + $0x40] sm:$0xf]
    %v139 = vld [vmem:[%s129 + $0x48] sm:$0xf]
    %v141 = vsel %vm35, %v138, 0
    %v144 = vsel %vm35, %v139, 0
    %146 = vmatprep.subr.mxu0 %v131
    %147 = vmatpush1.msra.mxu0 %v130
    %148 = vmatprep.subr.mxu0 %v133
    %149 = vmatpush1.msra.mxu0 %v132
    %150 = vmatprep.subr.mxu0 %v135
    %151 = vmatpush1.msra.mxu0 %v134
    %152 = vmatprep.subr.mxu0 %v137
    %153 = vmatpush1.msra.mxu0 %v136
    %154 = vmatprep.subr.mxu0 %v144
    %155 = vmatpush1.msra.mxu0 %v141
    %156 = vmatprep.subr.mxu0 0.0
    %157 = vmatpush1.msra.mxu0 0.0
    %158 = vmatprep.subr.mxu0 0.0
    %159 = vmatpush1.msra.mxu0 0.0
    %160 = vmatprep.subr.mxu0 0.0
    %161 = vmatpush1.msra.mxu0 0.0
    %162 = vmatprep.subr.mxu0 0.0
    %163 = vmatpush1.msra.mxu0 0.0
    %164 = vmatprep.subr.mxu0 0.0
    %165 = vmatpush1.msra.mxu0 0.0
    %166 = vmatprep.subr.mxu0 0.0
    %167 = vmatpush1.msra.mxu0 0.0
    %168 = vmatprep.subr.mxu0 0.0
    %169 = vmatpush1.msra.mxu0 0.0
    %170 = vmatprep.subr.mxu0 0.0
    %171 = vmatpush1.msra.mxu0 0.0
    %172 = vmatprep.subr.mxu0 0.0
    %173 = vmatpush1.msra.mxu0 0.0
    %174 = vmatprep.subr.mxu0 0.0
    %175 = vmatpush1.msra.mxu0 0.0
    %176 = vmatprep.subr.mxu0 0.0
    %177 = vmatpush1.msra.mxu0 0.0
    %178 = vmatprep.subr.mxu0 0.0
    %179 = vmatpush1.msra.mxu0 0.0
    %180 = vmatprep.subr.mxu0 0.0
    %181 = vmatpush1.msra.mxu0 0.0
    %182 = vmatprep.subr.mxu0 0.0
    %183 = vmatpush1.msra.mxu0 0.0
    %184 = vmatprep.subr.mxu0 0.0
    %185 = vmatpush1.msra.mxu0 0.0
    %186 = vmatprep.subr.mxu0 0.0
    %187 = vmatpush1.msra.mxu0 0.0
    %188 = vmatprep.subr.mxu0 0.0
    %189 = vmatpush1.msra.mxu0 0.0
    %190 = vmatprep.subr.mxu0 0.0
    %191 = vmatpush1.msra.mxu0 0.0
    %192 = vmatprep.subr.mxu0 0.0
    %193 = vmatpush1.msra.mxu0 0.0
    %194 = vmatprep.subr.mxu0 0.0
    %195 = vmatpush1.msra.mxu0 0.0
    %196 = vmatprep.subr.mxu0 0.0
    %197 = vmatpush1.msra.mxu0 0.0
    %198 = vmatprep.subr.mxu0 0.0
    %199 = vmatpush1.msra.mxu0 0.0
    %200 = vmatprep.subr.mxu0 0.0
    %201 = vmatpush1.msra.mxu0 0.0
    %202 = vmatprep.subr.mxu0 0.0
    %203 = vmatpush1.msra.mxu0 0.0
    %204 = vmatprep.subr.mxu0 0.0
    %205 = vmatpush1.msra.mxu0 0.0
    %206 = vmatprep.subr.mxu0 0.0
    %207 = vmatpush1.msra.mxu0 0.0
    %208 = vmatprep.subr.mxu0 0.0
    %209 = vmatpush1.msra.mxu0 0.0
    %210 = vmatprep.mubr.f32.mxu0 0.0
    %211 = vmatmul.mubr.f32.gmra.mrb[0].mxu0 %v33
    %v212 = vpop.f32.mrb[0].mxu0
    %v213 = vadd.f32 0.0, %v212
    %v214 = vpop.f32.mrb[0].mxu0
    %v215 = vadd.f32 0.0, %v214
    %216 = vdwg.mxu0
    %v217 = vmul.f32 %v213, %v116
    %v218 = vmul.f32 %v215, %v116
    %v219 = vadd.f32 %v217, %v123
    %v220 = vadd.f32 %v218, %v123
    %s221 = scalar_lea.vmem [#allocation2], 16
    %222 = vst [vmem:[%s221] sm:$0xff] %v219
    %223 = vst [vmem:[%s221 + $0x8] sm:$0xff] %v220
    // Predicated region
    $region18: #{tpu_custom_call.1} parent=1 // pred_check
      _
    $region19: #{tpu_custom_call.1} parent=1 // pred_check_branch
      %225 = sbr.rel (0) target = $region21
    $region20: #{tpu_custom_call.1} parent=1 // pred_region
      %s227 = ssub.s32 512, 512
      %228 = vsyncadd [#allocation3], %s227
      %s229 = sshll.u32 [#allocation2], 4
      %s230 = int_to_ptr.vmem [resolvable:$true] %s229
      %235 = dma.vmem_to_hbm [thread:$0]  %s230, 512, %s4, [#allocation3], 256, 256, 16
    $region21: #{tpu_custom_call.1} parent=1 // pred_fallthru
      _
    // Predicated region
    $region22: #{tpu_custom_call.1} parent=1 // pred_check
      _
    $region23: #{tpu_custom_call.1} parent=1 // pred_check_branch
      %237 = sbr.rel (0) target = $region25
    $region24: #{tpu_custom_call.1} parent=1 // pred_region
      %238 = dma.done [#allocation3], 512
    $region25: #{tpu_custom_call.1} parent=1 // pred_fallthru
      _
    %239 = vsyncpa [#allocation3], 1

</llo_original>
